<compile_context>
chip_gen: v7x
topology: tpu7x:2x2x1
jax: 0.10.0
libtpu: 0.0.40
codegen_flags: <defaults>
</compile_context>

<pallas_src>
import numpy as np
import jax
import jax.numpy as jnp
from jax import lax
from jax.experimental import pallas as pl
from jax.experimental.pallas import tpu as pltpu


# ----------------------------- deterministic precompute -----------------------------

def _hz_to_mel(f):
    return 2595.0 * np.log10(1.0 + f / 700.0)


def _mel_to_hz(m):
    return 700.0 * (10.0 ** (m / 2595.0) - 1.0)


def melscale_fbanks(n_freqs, f_min, f_max, n_mels, sample_rate):
    """torchaudio.functional.melscale_fbanks (mel_scale='htk', norm=None)."""
    all_freqs = np.linspace(0.0, sample_rate // 2, n_freqs)
    m_min, m_max = _hz_to_mel(f_min), _hz_to_mel(f_max)
    m_pts = np.linspace(m_min, m_max, n_mels + 2)
    f_pts = _mel_to_hz(m_pts)
    f_diff = f_pts[1:] - f_pts[:-1]                       # (n_mels+1,)
    slopes = f_pts[None, :] - all_freqs[:, None]          # (n_freqs, n_mels+2)
    down = -slopes[:, :-2] / f_diff[:-1]
    up = slopes[:, 2:] / f_diff[1:]
    return np.maximum(0.0, np.minimum(down, up)).astype(np.float32)   # (n_freqs, n_mels)


def full_window(n_fft, win_length):
    """torch.hann_window (periodic) centered in an n_fft frame (torch.stft behavior)."""
    n = np.arange(win_length)
    w = 0.5 - 0.5 * np.cos(2.0 * np.pi * n / win_length)
    if win_length < n_fft:
        out = np.zeros((n_fft,))
        off = (n_fft - win_length) // 2
        out[off:off + win_length] = w
        w = out
    return w


def make_packed_bases(n_fft, win_length, f_min, f_max, n_mels, sample_rate):
    """Window-folded packed real-DFT basis and transposed mel filterbank.

    basis [n_fft, n_fft]: columns [win*cos_0 .. win*cos_{F-1} | win*sin_1 .. win*sin_{F-2}]
                          (F = n_fft//2+1; sin_0 and sin_{F-1} are structurally zero)
    fbt   [n_mels, n_fft]: mel filterbank transposed, zero cols >= F.
    """
    n_freq = n_fft // 2 + 1
    n = np.arange(n_fft)[:, None].astype(np.float64)
    kc = np.arange(n_freq)[None, :].astype(np.float64)
    ks = np.arange(1, n_freq - 1)[None, :].astype(np.float64)
    win = full_window(n_fft, win_length)[:, None]
    cos_m = win * np.cos(2.0 * np.pi * n * kc / n_fft)    # [n_fft, n_freq]
    sin_m = win * np.sin(2.0 * np.pi * n * ks / n_fft)    # [n_fft, n_freq-2]; +sin: power only
    basis = np.concatenate([cos_m, sin_m], axis=1).astype(np.float32)   # [n_fft, n_fft]
    fb = melscale_fbanks(n_freq, f_min, f_max, n_mels, sample_rate)
    fbt = np.zeros((n_mels, n_fft), np.float32)
    fbt[:, :n_freq] = fb.T
    return basis, fbt


# ----------------------------- Pallas kernel -----------------------------

def _make_mel_kernel(hop, r, n_freq):
    """r = n_fft // hop frames per audio row; hop, r, n_freq are static."""

    def kernel(main_ref, tail_ref, basis_ref, fbt_ref, perm_ref, out_ref):
        # main_ref : (1, TFr, n_fft)  audio rows, n_fft samples each (bf16/f32)
        # tail_ref : (1, 8,  n_fft)   rows following the main block (row 0 is used)
        # basis_ref: (n_fft, n_fft)   window-folded packed real-DFT basis
        # fbt_ref  : (n_mels, n_fft)  mel filterbank^T (f32), zero cols >= n_freq
        # perm_ref : (TF, TF)         grouped->natural frame-order permutation
        # out_ref  : (1, n_mels, TF)  frames on the lane axis (lane-dense store)
        c0 = main_ref[0].astype(jnp.float32)                    # [TFr, n_fft]
        tfr, n_fft = c0.shape

        # c1[q] = audio row q+1 (the last one comes from the tail block)
        c1 = pltpu.roll(c0, tfr - 1, axis=0)                    # c1[q] = c0[(q+1) % TFr]
        rows = lax.broadcasted_iota(jnp.int32, (tfr, n_fft), 0)
        tail0 = tail_ref[0, 0:1, :].astype(jnp.float32)         # [1, n_fft]
        c1 = jnp.where(rows == tfr - 1, tail0, c1)

        # In-kernel framing, grouped order: group m holds frames f = r*q + m,
        #   fw_m[q, j] = audio[q*n_fft + m*hop + j]
        lanes = lax.broadcasted_iota(jnp.int32, (tfr, n_fft), 1)
        parts = [c0]
        for m in range(1, r):
            s = m * hop
            parts.append(jnp.where(lanes < n_fft - s,
                                   pltpu.roll(c0, n_fft - s, axis=1),
                                   pltpu.roll(c1, n_fft - s, axis=1)))
        fw = jnp.concatenate(parts, axis=0).astype(basis_ref.dtype)   # [TF, n_fft]

        # Windowed real DFT with the packed basis (one MXU matmul, no zero columns).
        ri = jnp.dot(fw, basis_ref[...],
                     preferred_element_type=jnp.float32)         # [TF, n_fft]
        sq = ri * ri
        freqs = lax.broadcasted_iota(jnp.int32, sq.shape, 1)
        sin_sq = pltpu.roll(sq, n_fft - (n_freq - 1), axis=1)    # col k <- col k+(F-1)
        power = sq + jnp.where((freqs >= 1) & (freqs <= n_freq - 2), sin_sq, 0.0)
        # columns >= n_freq of `power` are garbage but hit zero fbt columns below.

        # Mel projection -> [n_mels, TF] (columns still in grouped frame order).
        # The small operand (fbt / mel) is the one that gets relaid out, not the
        # [TF, n_fft] power tile (review item 6).
        mel_g = lax.dot_general(fbt_ref[...], power,
                                dimension_numbers=(((1,), (1,)), ((), ())),
                                preferred_element_type=jnp.float32)   # [n_mels, TF]
        # Restore natural frame order with a tiny permutation matmul (exact 0/1 weights).
        mel = jnp.dot(mel_g.astype(perm_ref.dtype), perm_ref[...],
                      preferred_element_type=jnp.float32)             # [n_mels, TF]
        out_ref[0] = jnp.log(mel + 0.001)

    return kernel


# ----------------------------- wrapper -----------------------------

def mel_spectrogram_fixed(x, *, sample_rate=16000, n_fft=128, win_length=None,
                          hop_length=32, f_min=0.0, f_max=None, n_mels=16,
                          frame_tile=512, dft_dtype=jnp.bfloat16):
    """Equivalent of MelSpectrogramFixed.forward for x of shape [B, T].

    Returns [B, n_mels, T // hop_length] (== torchaudio output with last frame
    dropped), float32.  dft_dtype=jnp.float32 gives a full-precision DFT path.
    """
    win_length = n_fft if win_length is None else win_length
    f_max = float(sample_rate // 2) if f_max is None else f_max

    B, T = x.shape
    n_freq = n_fft // 2 + 1
    pad = n_fft // 2
    # In-kernel framing path requirements (the demo / typical configs satisfy them).
    assert n_fft % 128 == 0, "in-kernel framing needs n_fft to be a multiple of 128"
    assert n_fft % hop_length == 0 and hop_length <= n_fft, "hop must divide n_fft"
    assert T > pad, "audio too short for center=True reflect padding"
    r = n_fft // hop_length
    n_frames = T // hop_length          # last STFT frame dropped
    assert n_frames >= 1, "audio too short"

    # Frame-tile size: multiple of 128 (lane-dense, unmasked output stores) and of
    # 8*r (aligned audio-row blocks).  Keep >= 4 grid steps when possible (v7x 2 TCs).
    quant = int(np.lcm(8 * r, 128))
    tf = max(quant, (int(frame_tile) // quant) * quant)
    while B * ((n_frames + tf - 1) // tf) < 4 and tf > quant:
        tf = max(quant, tf // 2)
    n_frames_pad = ((n_frames + tf - 1) // tf) * tf
    n_tiles = n_frames_pad // tf
    tfr = tf // r                        # audio rows (n_fft samples each) per tile

    # center=True reflect padding (torch.stft default pad_mode='reflect'), then lay
    # the audio out as rows of n_fft samples; the kernel rebuilds the overlapping
    # frames, so the 4x-overlapping frames array never touches HBM.
    xp = jnp.pad(x.astype(jnp.float32), ((0, 0), (pad, pad)), mode="reflect")
    total_rows = (n_tiles + 1) * tfr     # spare row-block: every block stays in bounds
    need = total_rows * n_fft
    extra = need - xp.shape[1]
    assert extra >= 0
    xp = jnp.pad(xp, ((0, 0), (0, extra)))
    audio = xp.astype(dft_dtype).reshape(B, total_rows, n_fft)

    basis_np, fbt_np = make_packed_bases(n_fft, win_length, f_min, f_max,
                                         n_mels, sample_rate)
    basis = jnp.asarray(basis_np, dtype=dft_dtype)
    fbt = jnp.asarray(fbt_np)                                    # f32
    # grouped column g = m*tfr + q  <->  natural frame column f = r*q + m
    g = np.arange(tf)
    perm_np = np.zeros((tf, tf), np.float32)
    perm_np[g, (g % tfr) * r + (g // tfr)] = 1.0
    perm = jnp.asarray(perm_np, dtype=dft_dtype)

    tail_blk = tfr // 8
    kernel = _make_mel_kernel(hop_length, r, n_freq)

    out = pl.pallas_call(
        kernel,
        out_shape=jax.ShapeDtypeStruct((B, n_mels, n_frames_pad), jnp.float32),
        grid_spec=pltpu.PrefetchScalarGridSpec(
            num_scalar_prefetch=0,
            grid=(B, n_tiles),
            in_specs=[
                # main audio rows for this tile
                pl.BlockSpec((1, tfr, n_fft), lambda b, t: (b, t, 0)),
                # the 8 rows right after the main block (first row is consumed)
                pl.BlockSpec((1, 8, n_fft), lambda b, t: (b, (t + 1) * tail_blk, 0)),
                pl.BlockSpec((n_fft, n_fft), lambda b, t: (0, 0)),
                pl.BlockSpec((n_mels, n_fft), lambda b, t: (0, 0)),
                pl.BlockSpec((tf, tf), lambda b, t: (0, 0)),
            ],
            out_specs=pl.BlockSpec((1, n_mels, tf), lambda b, t: (b, 0, t)),
        ),
        compiler_params=pltpu.CompilerParams(
            dimension_semantics=("parallel", "parallel")),
    )(audio, audio, basis, fbt, perm)

    if n_frames_pad != n_frames:
        out = out[..., :n_frames]
    return out


# ----------------------------- pure-JAX reference (independent math) -----------------------------

def _reference(x, *, sample_rate, n_fft, hop_length, n_mels, win_length, f_min, f_max):
    B, T = x.shape
    pad = n_fft // 2
    n_freq = n_fft // 2 + 1
    xp = jnp.pad(x.astype(jnp.float32), ((0, 0), (pad, pad)), mode="reflect")
    nf = T // hop_length
    idx = np.arange(nf)[:, None] * hop_length + np.arange(n_fft)[None, :]
    frames = jnp.take(xp, jnp.asarray(idx), axis=1)              # [B, nf, n_fft]
    win = jnp.asarray(full_window(n_fft, win_length), jnp.float32)
    fw = frames * win
    n = np.arange(n_fft)[:, None].astype(np.float64)
    k = np.arange(n_freq)[None, :].astype(np.float64)
    ang = 2.0 * np.pi * n * k / n_fft
    cosm = jnp.asarray(np.cos(ang), jnp.float32)
    sinm = jnp.asarray(np.sin(ang), jnp.float32)
    re = jnp.einsum("bfn,nk->bfk", fw, cosm, precision=lax.Precision.HIGHEST)
    im = jnp.einsum("bfn,nk->bfk", fw, sinm, precision=lax.Precision.HIGHEST)
    power = re * re + im * im
    fb = jnp.asarray(melscale_fbanks(n_freq, f_min, f_max, n_mels, sample_rate))
    mel = jnp.einsum("bfk,km->bmf", power, fb, precision=lax.Precision.HIGHEST)
    return jnp.log(mel + 0.001)


if __name__ == "__main__":
    key = jax.random.PRNGKey(0)
    B, T = 2, 256
    cfg = dict(sample_rate=16000, n_fft=128, hop_length=32, n_mels=16)
    x = jax.random.normal(key, (B, T), dtype=jnp.float32)

    # default (bf16 DFT) path
    y = jax.block_until_ready(mel_spectrogram_fixed(x, **cfg))

    expected_frames = T // cfg["hop_length"]        # last frame dropped
    assert y.shape == (B, cfg["n_mels"], expected_frames), y.shape
    assert bool(jnp.all(jnp.isfinite(y)))

    y_ref = _reference(x, win_length=cfg["n_fft"], f_min=0.0,
                       f_max=float(cfg["sample_rate"] // 2), **cfg)

    # structural check in full f32 (tight tolerance)
    y32 = jax.block_until_ready(
        mel_spectrogram_fixed(x, dft_dtype=jnp.float32, **cfg))
    err32 = float(jnp.max(jnp.abs(y32 - y_ref)))
    assert err32 < 2e-2, f"f32 path max |err| = {err32}"

    # bf16 default path: looser tolerance on log-mel (bf16 audio/basis rounding)
    err = jnp.abs(y - y_ref)
    mean_err, max_err = float(jnp.mean(err)), float(jnp.max(err))
    assert mean_err < 4e-2 and max_err < 0.5, (mean_err, max_err)

    print("KERNEL_OK")
</pallas_src>

<mosaic_0001>
module attributes {stable_mosaic.version = 11 : i64} {
  func.func @kernel(%arg0: i32, %arg1: i32, %arg2: memref<1x32x128xbf16, #tpu.memory_space<vmem>>, %arg3: memref<1x8x128xbf16, #tpu.memory_space<vmem>>, %arg4: memref<128x128xbf16, #tpu.memory_space<vmem>>, %arg5: memref<16x128xf32, #tpu.memory_space<vmem>>, %arg6: memref<128x128xbf16, #tpu.memory_space<vmem>>, %arg7: memref<1x16x128xf32, #tpu.memory_space<vmem>>) attributes {dimension_semantics = [#tpu.dimension_semantics<parallel>, #tpu.dimension_semantics<parallel>], iteration_bounds = array<i64: 2, 1>, scalar_prefetch = 0 : i64, scratch_operands = 0 : i64, tpu.core_type = #tpu.core_type<tc>, window_params = [{transform_indices = @transform_0, window_bounds = array<i64: 1, 32, 128>}, {transform_indices = @transform_1, window_bounds = array<i64: 1, 8, 128>}, {pipeline_mode = #tpu.pipeline_mode<synchronous>, transform_indices = @transform_2, window_bounds = array<i64: 128, 128>}, {pipeline_mode = #tpu.pipeline_mode<synchronous>, transform_indices = @transform_3, window_bounds = array<i64: 16, 128>}, {pipeline_mode = #tpu.pipeline_mode<synchronous>, transform_indices = @transform_4, window_bounds = array<i64: 128, 128>}, {transform_indices = @transform_5, window_bounds = array<i64: 1, 16, 128>}]} {
    %c0 = arith.constant 0 : index
    %c0_0 = arith.constant 0 : index
    %c0_1 = arith.constant 0 : index
    %0 = vector.load %arg2[%c0, %c0_0, %c0_1] : memref<1x32x128xbf16, #tpu.memory_space<vmem>>, vector<1x32x128xbf16>
    %1 = vector.shape_cast %0 : vector<1x32x128xbf16> to vector<32x128xbf16>
    %2 = arith.extf %1 : vector<32x128xbf16> to vector<32x128xf32>
    %c31_i32 = arith.constant 31 : i32
    %3 = tpu.dynamic_rotate %2 by %c31_i32 dim 0 : vector<32x128xf32>, i32 -> vector<32x128xf32>
    %4 = tpu.iota {dimensions = array<i32: 0>} : vector<32x128xi32>
    %c0_2 = arith.constant 0 : index
    %c0_3 = arith.constant 0 : index
    %c0_4 = arith.constant 0 : index
    %5 = vector.load %arg3[%c0_2, %c0_3, %c0_4] : memref<1x8x128xbf16, #tpu.memory_space<vmem>>, vector<1x1x128xbf16>
    %6 = vector.shape_cast %5 : vector<1x1x128xbf16> to vector<1x128xbf16>
    %7 = arith.extf %6 : vector<1x128xbf16> to vector<1x128xf32>
    %c31_i32_5 = arith.constant 31 : i32
    %8 = vector.broadcast %c31_i32_5 : i32 to vector<32x128xi32>
    %9 = arith.cmpi eq, %4, %8 : vector<32x128xi32>
    %10 = vector.shape_cast %7 : vector<1x128xf32> to vector<1x128xf32>
    %11 = vector.broadcast %10 : vector<1x128xf32> to vector<32x128xf32>
    %12 = arith.select %9, %11, %3 : vector<32x128xi1>, vector<32x128xf32>
    %13 = tpu.iota {dimensions = array<i32: 1>} : vector<32x128xi32>
    %c96_i32 = arith.constant 96 : i32
    %14 = vector.broadcast %c96_i32 : i32 to vector<32x128xi32>
    %15 = arith.cmpi slt, %13, %14 : vector<32x128xi32>
    %c96_i32_6 = arith.constant 96 : i32
    %16 = tpu.dynamic_rotate %2 by %c96_i32_6 dim 1 : vector<32x128xf32>, i32 -> vector<32x128xf32>
    %c96_i32_7 = arith.constant 96 : i32
    %17 = tpu.dynamic_rotate %12 by %c96_i32_7 dim 1 : vector<32x128xf32>, i32 -> vector<32x128xf32>
    %18 = arith.select %15, %16, %17 : vector<32x128xi1>, vector<32x128xf32>
    %c64_i32 = arith.constant 64 : i32
    %19 = vector.broadcast %c64_i32 : i32 to vector<32x128xi32>
    %20 = arith.cmpi slt, %13, %19 : vector<32x128xi32>
    %c64_i32_8 = arith.constant 64 : i32
    %21 = tpu.dynamic_rotate %2 by %c64_i32_8 dim 1 : vector<32x128xf32>, i32 -> vector<32x128xf32>
    %c64_i32_9 = arith.constant 64 : i32
    %22 = tpu.dynamic_rotate %12 by %c64_i32_9 dim 1 : vector<32x128xf32>, i32 -> vector<32x128xf32>
    %23 = arith.select %20, %21, %22 : vector<32x128xi1>, vector<32x128xf32>
    %c32_i32 = arith.constant 32 : i32
    %24 = vector.broadcast %c32_i32 : i32 to vector<32x128xi32>
    %25 = arith.cmpi slt, %13, %24 : vector<32x128xi32>
    %c32_i32_10 = arith.constant 32 : i32
    %26 = tpu.dynamic_rotate %2 by %c32_i32_10 dim 1 : vector<32x128xf32>, i32 -> vector<32x128xf32>
    %c32_i32_11 = arith.constant 32 : i32
    %27 = tpu.dynamic_rotate %12 by %c32_i32_11 dim 1 : vector<32x128xf32>, i32 -> vector<32x128xf32>
    %28 = arith.select %25, %26, %27 : vector<32x128xi1>, vector<32x128xf32>
    %29 = tpu.concatenate %2, %18, %23, %28 in 0 : vector<32x128xf32>, vector<32x128xf32>, vector<32x128xf32>, vector<32x128xf32> -> vector<128x128xf32>
    %30 = arith.truncf %29 : vector<128x128xf32> to vector<128x128xbf16>
    %c0_12 = arith.constant 0 : index
    %c0_13 = arith.constant 0 : index
    %31 = vector.load %arg4[%c0_12, %c0_13] : memref<128x128xbf16, #tpu.memory_space<vmem>>, vector<128x128xbf16>
    %cst = arith.constant dense<0.000000e+00> : vector<128x128xf32>
    %32 = tpu.matmul %30, %31, %cst {dimension_numbers = #tpu.dot_dimension_numbers<[1], [0], [0], [1], [0, 0, 1, 1], [], []>} : vector<128x128xbf16>, vector<128x128xbf16>, vector<128x128xf32> -> vector<128x128xf32>
    %33 = arith.mulf %32, %32 : vector<128x128xf32>
    %34 = tpu.iota {dimensions = array<i32: 1>} : vector<128x128xi32>
    %c64_i32_14 = arith.constant 64 : i32
    %35 = tpu.dynamic_rotate %33 by %c64_i32_14 dim 1 : vector<128x128xf32>, i32 -> vector<128x128xf32>
    %c1_i32 = arith.constant 1 : i32
    %36 = vector.broadcast %c1_i32 : i32 to vector<128x128xi32>
    %37 = arith.cmpi sge, %34, %36 : vector<128x128xi32>
    %c63_i32 = arith.constant 63 : i32
    %38 = vector.broadcast %c63_i32 : i32 to vector<128x128xi32>
    %39 = arith.cmpi sle, %34, %38 : vector<128x128xi32>
    %40 = arith.andi %37, %39 : vector<128x128xi1>
    %cst_15 = arith.constant 0.000000e+00 : f32
    %41 = vector.broadcast %cst_15 : f32 to vector<128x128xf32>
    %42 = arith.select %40, %35, %41 : vector<128x128xi1>, vector<128x128xf32>
    %43 = arith.addf %33, %42 : vector<128x128xf32>
    %c0_16 = arith.constant 0 : index
    %c0_17 = arith.constant 0 : index
    %44 = vector.load %arg5[%c0_16, %c0_17] : memref<16x128xf32, #tpu.memory_space<vmem>>, vector<16x128xf32>
    %cst_18 = arith.constant dense<0.000000e+00> : vector<16x128xf32>
    %45 = tpu.matmul %44, %43, %cst_18 {dimension_numbers = #tpu.dot_dimension_numbers<[1], [1], [0], [0], [0, 0, 1, 0], [], []>} : vector<16x128xf32>, vector<128x128xf32>, vector<16x128xf32> -> vector<16x128xf32>
    %46 = arith.truncf %45 : vector<16x128xf32> to vector<16x128xbf16>
    %c0_19 = arith.constant 0 : index
    %c0_20 = arith.constant 0 : index
    %47 = vector.load %arg6[%c0_19, %c0_20] : memref<128x128xbf16, #tpu.memory_space<vmem>>, vector<128x128xbf16>
    %cst_21 = arith.constant dense<0.000000e+00> : vector<16x128xf32>
    %48 = tpu.matmul %46, %47, %cst_21 {dimension_numbers = #tpu.dot_dimension_numbers<[1], [0], [0], [1], [0, 0, 1, 1], [], []>} : vector<16x128xbf16>, vector<128x128xbf16>, vector<16x128xf32> -> vector<16x128xf32>
    %cst_22 = arith.constant 1.000000e-03 : f32
    %49 = vector.broadcast %cst_22 : f32 to vector<16x128xf32>
    %50 = arith.addf %48, %49 : vector<16x128xf32>
    %51 = math.log %50 : vector<16x128xf32>
    %c0_23 = arith.constant 0 : index
    %c0_24 = arith.constant 0 : index
    %c0_25 = arith.constant 0 : index
    %52 = vector.load %arg7[%c0_23, %c0_24, %c0_25] : memref<1x16x128xf32, #tpu.memory_space<vmem>>, vector<1x16x128xf32>
    %53 = vector.shape_cast %52 : vector<1x16x128xf32> to vector<16x128xf32>
    %54 = vector.shape_cast %51 : vector<16x128xf32> to vector<1x16x128xf32>
    tpu.vector_store %arg7[%c0_23, %c0_24, %c0_25], %54 {strides = array<i32>} : memref<1x16x128xf32, #tpu.memory_space<vmem>>, vector<1x16x128xf32>,
    return
  }
  func.func @transform_0(%arg0: i32, %arg1: i32) -> (i32, i32, i32) {
    %c0_i32 = arith.constant 0 : i32
    %c0_i32_0 = arith.constant 0 : i32
    return %arg0, %arg1, %c0_i32 : i32, i32, i32
  }
  func.func @transform_1(%arg0: i32, %arg1: i32) -> (i32, i32, i32) {
    %c1_i32 = arith.constant 1 : i32
    %0 = arith.addi %arg1, %c1_i32 : i32
    %c4_i32 = arith.constant 4 : i32
    %1 = arith.muli %0, %c4_i32 : i32
    %c0_i32 = arith.constant 0 : i32
    %c0_i32_0 = arith.constant 0 : i32
    return %arg0, %1, %c0_i32 : i32, i32, i32
  }
  func.func @transform_2(%arg0: i32, %arg1: i32) -> (i32, i32) {
    %c0_i32 = arith.constant 0 : i32
    %c0_i32_0 = arith.constant 0 : i32
    %c0_i32_1 = arith.constant 0 : i32
    return %c0_i32, %c0_i32_0 : i32, i32
  }
  func.func @transform_3(%arg0: i32, %arg1: i32) -> (i32, i32) {
    %c0_i32 = arith.constant 0 : i32
    %c0_i32_0 = arith.constant 0 : i32
    %c0_i32_1 = arith.constant 0 : i32
    return %c0_i32, %c0_i32_0 : i32, i32
  }
  func.func @transform_4(%arg0: i32, %arg1: i32) -> (i32, i32) {
    %c0_i32 = arith.constant 0 : i32
    %c0_i32_0 = arith.constant 0 : i32
    %c0_i32_1 = arith.constant 0 : i32
    return %c0_i32, %c0_i32_0 : i32, i32
  }
  func.func @transform_5(%arg0: i32, %arg1: i32) -> (i32, i32, i32) {
    %c0_i32 = arith.constant 0 : i32
    %c0_i32_0 = arith.constant 0 : i32
    return %arg0, %c0_i32, %arg1 : i32, i32, i32
  }
}

</mosaic_0001>

<llo_original>
// kernel: tpu_custom_call.1
$region0: #{tpu_custom_call.1}
  #allocation0 [shape = 'u32[]', space=smem, size = 0x4, offset = 0x4, fixed_abs, tag = 'smem constant byte address 0x4 - core index']
  #allocation1 [shape = 'u32[144,128]{1,0:T(1,128)}', space=vmem, size = 0x12000, scoped, tag = 'internal scratch']
  %s0 = inlined_call_operand.hbm [shape: bf16[2,64,128], index: 0, kind: input, shape index: {}]
  %s1 = inlined_call_operand.hbm [shape: bf16[2,64,128], index: 1, kind: input, shape index: {}]
  %s2 = inlined_call_operand.hbm [shape: bf16[128,128], index: 2, kind: input, shape index: {}]
  %s3 = inlined_call_operand.hbm [shape: f32[16,128], index: 3, kind: input, shape index: {}]
  %s4 = inlined_call_operand.hbm [shape: bf16[128,128], index: 4, kind: input, shape index: {}]
  %s5 = inlined_call_operand.hbm [shape: f32[2,16,128], index: 5, kind: output, shape index: {}]
  %s6 = sld [smem:[#allocation0]]
  $region73: #{tpu_custom_call.1} parent=0
    _
  %s8 = ssub.s32 1, %s6
  %s9 = scalar_select 0, %s8, %s6
  $region1: #{tpu_custom_call.1} parent=0
    #allocation2 [shape = 'u8[16384]{0}', space=vmem, size = 0x4000, scoped, tag = 'input window, operand 0']
    #allocation3 [shape = 's32[2]{0}', space=sflag, size = 0x8, scoped, tag = 'scoped memory for tpu_custom_call.1']
    #allocation4 [shape = 's32[2]{0}', space=sflag, size = 0x8, scoped, tag = 'scoped memory for tpu_custom_call.1']
    #allocation5 [shape = 'u8[4096]{0}', space=vmem, size = 0x1000, scoped, tag = 'input window, operand 1']
    #allocation6 [shape = 's32[2]{0}', space=sflag, size = 0x8, scoped, tag = 'scoped memory for tpu_custom_call.1']
    #allocation7 [shape = 'u8[32768]{0}', space=vmem, size = 0x8000, scoped, tag = 'input window, operand 2, single buffered']
    #allocation8 [shape = 'u8[8192]{0}', space=vmem, size = 0x2000, scoped, tag = 'input window, operand 3, single buffered']
    #allocation9 [shape = 's32[1]{0}', space=sflag, size = 0x4, scoped, tag = 'scoped memory for tpu_custom_call.1']
    #allocation10 [shape = 'u8[32768]{0}', space=vmem, size = 0x8000, scoped, tag = 'input window, operand 4, single buffered']
    #allocation11 [shape = 'u8[16384]{0}', space=vmem, size = 0x4000, scoped, tag = 'output window, operand 0']
    %10 = vsyncpa [#allocation3], 0
    %s11 = scalar_lea.sflag [#allocation3], 1
    %12 = vsyncpa %s11, 0
    %13 = vsyncpa [#allocation6], 0
    %s14 = scalar_lea.sflag [#allocation6], 1
    %15 = vsyncpa %s14, 0
    %16 = vsyncpa [#allocation9], 0
    %17 = vsyncpa [#allocation4], 0
    %s18 = scalar_lea.sflag [#allocation4], 1
    %19 = vsyncpa %s18, 0
    loop: start=0, step=1, limit=4
    $region2: #{tpu_custom_call.1} parent=1 // loop_pre_header
      _
    $region3: #{tpu_custom_call.1} parent=1 // loop_header
      %s21 = sphi 0, %s25
      %p22 = scmp.ge.s32.totalorder %s21, 4
      %s28 = sphi 0, %s40
      %s29 = sphi 0, %s36
      %s30 = sphi 0, %s28
      %s31 = sphi 0, %s29
      %s32 = sphi 0, %s30
      %s33 = sphi 0, %s31
      %s45 = sphi 0, %s47
      %s48 = sphi 0, %s45
      %s49 = sphi 0, %s48
      %s65 = sphi 0, %s49
      %s77 = sphi 0, %s79
      %s80 = sphi 0, %s77
      %s81 = sphi 0, %s80
      %s97 = sphi 0, %s81
      %s101 = sphi 0, %s101
      %s103 = sphi 0, %s101
      %s104 = sphi 0, %s103
      %s118 = sphi 0, %s104
      %s122 = sphi 0, %s122
      %s124 = sphi 0, %s122
      %s125 = sphi 0, %s124
      %s139 = sphi 0, %s125
      %s143 = sphi 0, %s143
      %s145 = sphi 0, %s143
      %s146 = sphi 0, %s145
      %s160 = sphi 0, %s146
      %s168 = sphi 0, %s170
      %s171 = sphi 0, %s168
      %s172 = sphi 0, %s171
      %s188 = sphi 0, %s172
    $region4: #{tpu_custom_call.1} parent=1 // loop_header_branch
      %24 = sbr.rel (%p22) target = $region8
    $region5: #{tpu_custom_call.1} parent=1 // loop_body
      %s26 = ssub.s32 %s21, 1
      %s27 = ssub.s32 %s21, 2
      %s34 = sadd.s32 1, %s29
      %p35 = scmp.ge.s32.totalorder %s34, 1
      %s36 = scalar_select %p35, 0, %s34
      %s37 = sadd.s32 1, %s28
      %s38 = scalar_select %p35, %s37, %s28
      %p39 = scmp.ge.s32.totalorder %s38, 2
      %s40 = scalar_select %p39, 0, %s38
      %s41 = ssub.s32 %s28, %s40
      %s42 = ssub.s32 %s29, %s36
      %s43 = sor.u32 %s41, %s42
      %p44 = scmp.eq.s32.totalorder %s43, 0
      %s46 = sadd.s32 %s45, 1
      %s47 = scalar_select %p44, %s45, %s46
      %p50 = pneg %p44
      %p51 = scmp.eq.s32.totalorder %s21, 1
      %p52 = por %p50, %p51
      %p53 = scmp.ne.s32.totalorder %s45, %s48
      %p54 = scmp.eq.s32.totalorder %s21, 0
      %p55 = por %p53, %p54
      %p56 = scmp.ne.s32.totalorder %s45, %s48
      %p57 = scmp.eq.s32.totalorder %s26, 1
      %p58 = por %p56, %p57
      %p59 = scmp.ne.s32.totalorder %s48, %s49
      %p60 = scmp.eq.s32.totalorder %s26, 0
      %p61 = por %p59, %p60
      %p62 = scmp.ne.s32.totalorder %s48, %s49
      %p63 = scmp.eq.s32.totalorder %s27, 1
      %p64 = por %p62, %p63
      %p66 = scmp.ne.s32.totalorder %s49, %s65
      %p67 = scmp.eq.s32.totalorder %s27, 0
      %p68 = por %p66, %p67
      %s69 = sadd.s32 %s29, 1
      %s70 = smul.u32 %s69, 4
      %s71 = sadd.s32 %s36, 1
      %s72 = smul.u32 %s71, 4
      %s73 = ssub.s32 %s28, %s40
      %s74 = ssub.s32 %s70, %s72
      %s75 = sor.u32 %s73, %s74
      %p76 = scmp.eq.s32.totalorder %s75, 0
      %s78 = sadd.s32 %s77, 1
      %s79 = scalar_select %p76, %s77, %s78
      %p82 = pneg %p76
      %p83 = scmp.eq.s32.totalorder %s21, 1
      %p84 = por %p82, %p83
      %p85 = scmp.ne.s32.totalorder %s77, %s80
      %p86 = scmp.eq.s32.totalorder %s21, 0
      %p87 = por %p85, %p86
      %p88 = scmp.ne.s32.totalorder %s77, %s80
      %p89 = scmp.eq.s32.totalorder %s26, 1
      %p90 = por %p88, %p89
      %p91 = scmp.ne.s32.totalorder %s80, %s81
      %p92 = scmp.eq.s32.totalorder %s26, 0
      %p93 = por %p91, %p92
      %p94 = scmp.ne.s32.totalorder %s80, %s81
      %p95 = scmp.eq.s32.totalorder %s27, 1
      %p96 = por %p94, %p95
      %p98 = scmp.ne.s32.totalorder %s81, %s97
      %p99 = scmp.eq.s32.totalorder %s27, 0
      %p100 = por %p98, %p99
      %s102 = sadd.s32 %s101, 1
      %p105 = scmp.eq.s32.totalorder %s21, 1
      %p106 = scmp.ne.s32.totalorder %s101, %s103
      %p107 = scmp.eq.s32.totalorder %s21, 0
      %p108 = por %p106, %p107
      %p109 = scmp.ne.s32.totalorder %s101, %s103
      %p110 = scmp.eq.s32.totalorder %s26, 1
      %p111 = por %p109, %p110
      %p112 = scmp.ne.s32.totalorder %s103, %s104
      %p113 = scmp.eq.s32.totalorder %s26, 0
      %p114 = por %p112, %p113
      %p115 = scmp.ne.s32.totalorder %s103, %s104
      %p116 = scmp.eq.s32.totalorder %s27, 1
      %p117 = por %p115, %p116
      %p119 = scmp.ne.s32.totalorder %s104, %s118
      %p120 = scmp.eq.s32.totalorder %s27, 0
      %p121 = por %p119, %p120
      %s123 = sadd.s32 %s122, 1
      %p126 = scmp.eq.s32.totalorder %s21, 1
      %p127 = scmp.ne.s32.totalorder %s122, %s124
      %p128 = scmp.eq.s32.totalorder %s21, 0
      %p129 = por %p127, %p128
      %p130 = scmp.ne.s32.totalorder %s122, %s124
      %p131 = scmp.eq.s32.totalorder %s26, 1
      %p132 = por %p130, %p131
      %p133 = scmp.ne.s32.totalorder %s124, %s125
      %p134 = scmp.eq.s32.totalorder %s26, 0
      %p135 = por %p133, %p134
      %p136 = scmp.ne.s32.totalorder %s124, %s125
      %p137 = scmp.eq.s32.totalorder %s27, 1
      %p138 = por %p136, %p137
      %p140 = scmp.ne.s32.totalorder %s125, %s139
      %p141 = scmp.eq.s32.totalorder %s27, 0
      %p142 = por %p140, %p141
      %s144 = sadd.s32 %s143, 1
      %p147 = scmp.eq.s32.totalorder %s21, 1
      %p148 = scmp.ne.s32.totalorder %s143, %s145
      %p149 = scmp.eq.s32.totalorder %s21, 0
      %p150 = por %p148, %p149
      %p151 = scmp.ne.s32.totalorder %s143, %s145
      %p152 = scmp.eq.s32.totalorder %s26, 1
      %p153 = por %p151, %p152
      %p154 = scmp.ne.s32.totalorder %s145, %s146
      %p155 = scmp.eq.s32.totalorder %s26, 0
      %p156 = por %p154, %p155
      %p157 = scmp.ne.s32.totalorder %s145, %s146
      %p158 = scmp.eq.s32.totalorder %s27, 1
      %p159 = por %p157, %p158
      %p161 = scmp.ne.s32.totalorder %s146, %s160
      %p162 = scmp.eq.s32.totalorder %s27, 0
      %p163 = por %p161, %p162
      %s164 = ssub.s32 %s28, %s40
      %s165 = ssub.s32 %s29, %s36
      %s166 = sor.u32 %s164, %s165
      %p167 = scmp.eq.s32.totalorder %s166, 0
      %s169 = sadd.s32 %s168, 1
      %s170 = scalar_select %p167, %s168, %s169
      %p173 = pneg %p167
      %p174 = scmp.eq.s32.totalorder %s21, 1
      %p175 = por %p173, %p174
      %p176 = scmp.ne.s32.totalorder %s168, %s171
      %p177 = scmp.eq.s32.totalorder %s21, 0
      %p178 = por %p176, %p177
      %p179 = scmp.ne.s32.totalorder %s168, %s171
      %p180 = scmp.eq.s32.totalorder %s26, 1
      %p181 = por %p179, %p180
      %p182 = scmp.ne.s32.totalorder %s171, %s172
      %p183 = scmp.eq.s32.totalorder %s26, 0
      %p184 = por %p182, %p183
      %p185 = scmp.ne.s32.totalorder %s171, %s172
      %p186 = scmp.eq.s32.totalorder %s27, 1
      %p187 = por %p185, %p186
      %p189 = scmp.ne.s32.totalorder %s172, %s188
      %p190 = scmp.eq.s32.totalorder %s27, 0
      %p191 = por %p189, %p190
      %p192 = scmp.le.s32.totalorder 1, %s21
      %p193 = scmp.lt.s32.totalorder %s21, 3
      %p194 = pnand %p192, %p193
      %p195 = pneg %p194
      // Predicated region
      $region9: #{tpu_custom_call.1} parent=5 // pred_check
        _
      $region10: #{tpu_custom_call.1} parent=5 // pred_check_branch
        %197 = sbr.rel (%p194) target = $region12
      $region11: #{tpu_custom_call.1} parent=5 // pred_region
        %s198 = ssub.s32 %s21, 1
        // Predicated region
        $region13: #{tpu_custom_call.1} parent=11 // pred_check
          %p199 = pneg %p114
        $region14: #{tpu_custom_call.1} parent=11 // pred_check_branch
          %201 = sbr.rel (%p199) target = $region16
        $region15: #{tpu_custom_call.1} parent=11 // pred_region
          %s203 = ssub.s32 1024, 1024
          %204 = vsyncadd [#allocation6], %s203
          %s205 = sshll.u32 [#allocation7], 4
          %s206 = int_to_ptr.vmem [resolvable:$true] %s205
          %211 = dma.hbm_to_vmem [thread:$0]  %s2, 1024, %s206, [#allocation6], 64, 64, 4
        $region16: #{tpu_custom_call.1} parent=11 // pred_fallthru
          _
        // Predicated region
        $region17: #{tpu_custom_call.1} parent=11 // pred_check
          %p212 = pneg %p135
        $region18: #{tpu_custom_call.1} parent=11 // pred_check_branch
          %214 = sbr.rel (%p212) target = $region20
        $region19: #{tpu_custom_call.1} parent=11 // pred_region
          %s216 = ssub.s32 256, 256
          %217 = vsyncadd [#allocation9], %s216
          %s218 = sshll.u32 [#allocation8], 4
          %s219 = int_to_ptr.vmem [resolvable:$true] %s218
          %224 = dma.hbm_to_vmem [thread:$0]  %s3, 256, %s219, [#allocation9], 128, 128, 8
        $region20: #{tpu_custom_call.1} parent=11 // pred_fallthru
          _
        // Predicated region
        $region21: #{tpu_custom_call.1} parent=11 // pred_check
          %p225 = pneg %p156
        $region22: #{tpu_custom_call.1} parent=11 // pred_check_branch
          %227 = sbr.rel (%p225) target = $region24
        $region23: #{tpu_custom_call.1} parent=11 // pred_region
          %s229 = ssub.s32 1024, 1024
          %230 = vsyncadd [#allocation9], %s229
          %s231 = sshll.u32 [#allocation10], 4
          %s232 = int_to_ptr.vmem [resolvable:$true] %s231
          %237 = dma.hbm_to_vmem [thread:$0]  %s4, 1024, %s232, [#allocation9], 64, 64, 4
        $region24: #{tpu_custom_call.1} parent=11 // pred_fallthru
          _
      $region12: #{tpu_custom_call.1} parent=5 // pred_fallthru
        _
      %p238 = scmp.lt.s32.totalorder %s21, 2
      // Predicated region
      $region25: #{tpu_custom_call.1} parent=5 // pred_check
        %p239 = pneg %p238
      $region26: #{tpu_custom_call.1} parent=5 // pred_check_branch
        %241 = sbr.rel (%p239) target = $region28
      $region27: #{tpu_custom_call.1} parent=5 // pred_region
        // Predicated region
        $region29: #{tpu_custom_call.1} parent=27 // pred_check
          %p242 = pneg %p55
        $region30: #{tpu_custom_call.1} parent=27 // pred_check_branch
          %244 = sbr.rel (%p242) target = $region32
        $region31: #{tpu_custom_call.1} parent=27 // pred_region
          %s245 = sand.u32 %s45, 1
          %s246 = scalar_lea.sflag [#allocation3], %s245
          %s247 = sand.u32 %s45, 1
          %s248 = smul.addr %s247, 16
          %s249 = scalar_lea.vmem [#allocation2], %s248
          %s250 = smul.u32 4, %s29
          %s252 = ssub.s32 256, 256
          %253 = vsyncadd %s246, %s252
          %s254 = smul.addr %s28, 8
          %s255 = sadd.s32 %s250, %s254
          %s256 = smul.addr %s255, 64
          %s257 = scalar_lea.hbm %s0, %s256
          %s258 = sshll.u32 %s249, 4
          %s259 = int_to_ptr.vmem [resolvable:$true] %s258
          %264 = dma.hbm_to_vmem [thread:$0]  %s257, 256, %s259, %s246, 64, 64, 4
        $region32: #{tpu_custom_call.1} parent=27 // pred_fallthru
          _
        // Predicated region
        $region33: #{tpu_custom_call.1} parent=27 // pred_check
          %p265 = pneg %p87
        $region34: #{tpu_custom_call.1} parent=27 // pred_check_branch
          %267 = sbr.rel (%p265) target = $region36
        $region35: #{tpu_custom_call.1} parent=27 // pred_region
          %s268 = sand.u32 %s21, 1
          %s269 = scalar_lea.sflag [#allocation6], %s268
          %s270 = sand.u32 %s77, 1
          %s271 = smul.addr %s270, 4
          %s272 = scalar_lea.vmem [#allocation5], %s271
          %s273 = sadd.s32 %s29, 1
          %s274 = smul.u32 %s273, 4
          %s276 = ssub.s32 64, 64
          %277 = vsyncadd %s269, %s276
          %s278 = smul.addr %s28, 8
          %s279 = sadd.s32 %s274, %s278
          %s280 = smul.addr %s279, 64
          %s281 = scalar_lea.hbm %s1, %s280
          %s283 = sshll.u32 %s272, 4
          %s284 = int_to_ptr.vmem [resolvable:$true] %s283
          %286 = dma.hbm_to_vmem [thread:$0]  %s281, 64, %s284, %s269
        $region36: #{tpu_custom_call.1} parent=27 // pred_fallthru
          _
      $region28: #{tpu_custom_call.1} parent=5 // pred_fallthru
        _
      %p287 = scmp.le.s32.totalorder 1, %s21
      %p288 = scmp.lt.s32.totalorder %s21, 3
      %p289 = pnand %p287, %p288
      %p290 = pneg %p289
      // Predicated region
      $region37: #{tpu_custom_call.1} parent=5 // pred_check
        _
      $region38: #{tpu_custom_call.1} parent=5 // pred_check_branch
        %292 = sbr.rel (%p289) target = $region40
      $region39: #{tpu_custom_call.1} parent=5 // pred_region
        %s293 = ssub.s32 %s21, 1
        %s294 = sand.u32 %s48, 1
        %s295 = scalar_lea.sflag [#allocation3], %s294
        %s296 = sand.u32 %s48, 1
        %s297 = smul.addr %s296, 16
        %s298 = scalar_lea.vmem [#allocation2], %s297
        // Predicated region
        $region41: #{tpu_custom_call.1} parent=39 // pred_check
          %p299 = pneg %p61
        $region42: #{tpu_custom_call.1} parent=39 // pred_check_branch
          %301 = sbr.rel (%p299) target = $region44
        $region43: #{tpu_custom_call.1} parent=39 // pred_region
          %302 = dma.done %s295, 256
        $region44: #{tpu_custom_call.1} parent=39 // pred_fallthru
          _
        %s303 = sand.u32 %s26, 1
        %s304 = scalar_lea.sflag [#allocation6], %s303
        %s305 = sand.u32 %s80, 1
        %s306 = smul.addr %s305, 4
        %s307 = scalar_lea.vmem [#allocation5], %s306
        // Predicated region
        $region45: #{tpu_custom_call.1} parent=39 // pred_check
          %p308 = pneg %p93
        $region46: #{tpu_custom_call.1} parent=39 // pred_check_branch
          %310 = sbr.rel (%p308) target = $region48
        $region47: #{tpu_custom_call.1} parent=39 // pred_region
          %311 = dma.done %s304, 64
        $region48: #{tpu_custom_call.1} parent=39 // pred_fallthru
          _
        // Predicated region
        $region49: #{tpu_custom_call.1} parent=39 // pred_check
          %p312 = pneg %p114
        $region50: #{tpu_custom_call.1} parent=39 // pred_check_branch
          %314 = sbr.rel (%p312) target = $region52
        $region51: #{tpu_custom_call.1} parent=39 // pred_region
          %315 = dma.done [#allocation6], 1024
        $region52: #{tpu_custom_call.1} parent=39 // pred_fallthru
          _
        // Predicated region
        $region53: #{tpu_custom_call.1} parent=39 // pred_check
          %p316 = pneg %p135
        $region54: #{tpu_custom_call.1} parent=39 // pred_check_branch
          %318 = sbr.rel (%p316) target = $region56
        $region55: #{tpu_custom_call.1} parent=39 // pred_region
          %319 = dma.done [#allocation9], 256
        $region56: #{tpu_custom_call.1} parent=39 // pred_fallthru
          _
        // Predicated region
        $region57: #{tpu_custom_call.1} parent=39 // pred_check
          %p320 = pneg %p156
        $region58: #{tpu_custom_call.1} parent=39 // pred_check_branch
          %322 = sbr.rel (%p320) target = $region60
        $region59: #{tpu_custom_call.1} parent=39 // pred_region
          %323 = dma.done [#allocation9], 1024
        $region60: #{tpu_custom_call.1} parent=39 // pred_fallthru
          _
        %s324 = sand.u32 %s48, 1
        %s325 = scalar_lea.sflag [#allocation3], %s324
        %s326 = sand.u32 %s48, 1
        %s327 = smul.addr %s326, 16
        %s328 = scalar_lea.vmem [#allocation2], %s327
        %p329 = pneg %p61
        %p330 = pneg %p58
        %s331 = sand.u32 %s26, 1
        %s332 = scalar_lea.sflag [#allocation6], %s331
        %s333 = sand.u32 %s80, 1
        %s334 = smul.addr %s333, 4
        %s335 = scalar_lea.vmem [#allocation5], %s334
        %p336 = pneg %p93
        %p337 = pneg %p90
        %p338 = pneg %p114
        %p339 = pneg %p111
        %p340 = pneg %p135
        %p341 = pneg %p132
        %p342 = pneg %p156
        %p343 = pneg %p153
        %p344 = pneg %p184
        %p345 = pneg %p181
        %s346 = sand.u32 %s171, 1
        %s347 = scalar_lea.sflag [#allocation4], %s346
        %s348 = sand.u32 %s171, 1
        %s349 = smul.addr %s348, 16
        %s350 = scalar_lea.vmem [#allocation11], %s349
        %s351 = smul.u32 4, %s31
        %s352 = sadd.s32 %s31, 1
        %s353 = smul.u32 %s352, 4
        %v355 = vld [vmem:[%s298] sm:$0xf]
        %v356 = vld [vmem:[%s298 + $0x4] sm:$0xf]
        %v357 = vld [vmem:[%s298 + $0x8] sm:$0xf]
        %v358 = vld [vmem:[%s298 + $0xc] sm:$0xf]
        %v359 = vunpack.c.l.bf16 %v355
        %v360 = vunpack.c.l.bf16 %v356
        %v361 = vunpack.c.l.bf16 %v357
        %v362 = vunpack.c.l.bf16 %v358
        %v363 = vrot.slane %v359, 1
        %v364 = vrot.slane %v360, 1
        %v365 = vrot.slane %v361, 1
        %v366 = vrot.slane %v362, 1
        %v367 = vlaneseq
        %v368 = vshrl.u32 %v367, 7
        %vm369 = vcmp.lt.s32.totalorder %v368, 7
        %v370 = vsel %vm369, %v365, %v366
        %v371 = vsel %vm369, %v364, %v365
        %v372 = vsel %vm369, %v363, %v364
        %v373 = vsel %vm369, %v366, %v363
        %v374 = vadd.s32 %v368, 8
        %v375 = vadd.s32 %v368, 16
        %v376 = vadd.s32 %v368, 24
        %v377 = vld [vmem:[%s307] sm:$0x1]
        %v378 = vunpack.c.l.bf16 %v377
        %vm379 = vcmp.eq.s32.totalorder %v368, 31
        %vm380 = vcmp.eq.s32.totalorder %v374, 31
        %vm381 = vcmp.eq.s32.totalorder %v375, 31
        %vm382 = vcmp.eq.s32.totalorder %v376, 31
        %v383 = vlaneseq
        %v384 = vshrl.u32 %v383, 7
        %v385 = vsub.s32 0, %v384
        %v386 = vrot.slane %v378, %v385
        %v387 = vsel %vm379, %v386, %v372
        %v388 = vsel %vm380, %v386, %v371
        %v389 = vsel %vm381, %v386, %v370
        %v390 = vsel %vm382, %v386, %v373
        %v391 = vlaneseq
        %v392 = vand.u32 %v391, 127
        %vm393 = vcmp.lt.s32.totalorder %v392, 96
        %394 = vrot.lane.b32.xlu0 %v359, 96
        %v395 = vpop.permute.xlu0 %394
        %396 = vrot.lane.b32.xlu0 %v360, 96
        %v397 = vpop.permute.xlu0 %396
        %398 = vrot.lane.b32.xlu0 %v361, 96
        %v399 = vpop.permute.xlu0 %398
        %400 = vrot.lane.b32.xlu0 %v362, 96
        %v401 = vpop.permute.xlu0 %400
        %402 = vrot.lane.b32.xlu0 %v387, 96
        %v403 = vpop.permute.xlu0 %402
        %404 = vrot.lane.b32.xlu0 %v388, 96
        %v405 = vpop.permute.xlu0 %404
        %406 = vrot.lane.b32.xlu0 %v389, 96
        %v407 = vpop.permute.xlu0 %406
        %408 = vrot.lane.b32.xlu0 %v390, 96
        %v409 = vpop.permute.xlu0 %408
        %v410 = vsel %vm393, %v395, %v403
        %v411 = vsel %vm393, %v397, %v405
        %v412 = vsel %vm393, %v399, %v407
        %v413 = vsel %vm393, %v401, %v409
        %vm414 = vcmp.lt.s32.totalorder %v392, 64
        %415 = vrot.lane.b32.xlu0 %v359, 64
        %v416 = vpop.permute.xlu0 %415
        %417 = vrot.lane.b32.xlu0 %v360, 64
        %v418 = vpop.permute.xlu0 %417
        %419 = vrot.lane.b32.xlu0 %v361, 64
        %v420 = vpop.permute.xlu0 %419
        %421 = vrot.lane.b32.xlu0 %v362, 64
        %v422 = vpop.permute.xlu0 %421
        %423 = vrot.lane.b32.xlu0 %v387, 64
        %v424 = vpop.permute.xlu0 %423
        %425 = vrot.lane.b32.xlu0 %v388, 64
        %v426 = vpop.permute.xlu0 %425
        %427 = vrot.lane.b32.xlu0 %v389, 64
        %v428 = vpop.permute.xlu0 %427
        %429 = vrot.lane.b32.xlu0 %v390, 64
        %v430 = vpop.permute.xlu0 %429
        %v431 = vsel %vm414, %v416, %v424
        %v432 = vsel %vm414, %v418, %v426
        %v433 = vsel %vm414, %v420, %v428
        %v434 = vsel %vm414, %v422, %v430
        %vm435 = vcmp.lt.s32.totalorder %v392, 32
        %436 = vrot.lane.b32.xlu0 %v359, 32
        %v437 = vpop.permute.xlu0 %436
        %438 = vrot.lane.b32.xlu0 %v360, 32
        %v439 = vpop.permute.xlu0 %438
        %440 = vrot.lane.b32.xlu0 %v361, 32
        %v441 = vpop.permute.xlu0 %440
        %442 = vrot.lane.b32.xlu0 %v362, 32
        %v443 = vpop.permute.xlu0 %442
        %444 = vrot.lane.b32.xlu0 %v387, 32
        %v445 = vpop.permute.xlu0 %444
        %446 = vrot.lane.b32.xlu0 %v388, 32
        %v447 = vpop.permute.xlu0 %446
        %448 = vrot.lane.b32.xlu0 %v389, 32
        %v449 = vpop.permute.xlu0 %448
        %450 = vrot.lane.b32.xlu0 %v390, 32
        %v451 = vpop.permute.xlu0 %450
        %v452 = vsel %vm435, %v437, %v445
        %v453 = vsel %vm435, %v439, %v447
        %v454 = vsel %vm435, %v441, %v449
        %v455 = vsel %vm435, %v443, %v451
        %v456 = vpack.c.bf16 %v360, %v359
        %v457 = vpack.c.bf16 %v362, %v361
        %v458 = vpack.c.bf16 %v411, %v410
        %v459 = vpack.c.bf16 %v413, %v412
        %v460 = vpack.c.bf16 %v432, %v431
        %v461 = vpack.c.bf16 %v434, %v433
        %v462 = vpack.c.bf16 %v453, %v452
        %v463 = vpack.c.bf16 %v455, %v454
        %v464 = vld [vmem:[#allocation7] sm:$0xf]
        %v465 = vld [vmem:[#allocation7 + $0x4] sm:$0xf]
        %v466 = vld [vmem:[#allocation7 + $0x8] sm:$0xf]
        %v467 = vld [vmem:[#allocation7 + $0xc] sm:$0xf]
        %v468 = vld [vmem:[#allocation7 + $0x10] sm:$0xf]
        %v469 = vld [vmem:[#allocation7 + $0x14] sm:$0xf]
        %v470 = vld [vmem:[#allocation7 + $0x18] sm:$0xf]
        %v471 = vld [vmem:[#allocation7 + $0x1c] sm:$0xf]
        %v472 = vld [vmem:[#allocation7 + $0x20] sm:$0xf]
        %v473 = vld [vmem:[#allocation7 + $0x24] sm:$0xf]
        %v474 = vld [vmem:[#allocation7 + $0x28] sm:$0xf]
        %v475 = vld [vmem:[#allocation7 + $0x2c] sm:$0xf]
        %v476 = vld [vmem:[#allocation7 + $0x30] sm:$0xf]
        %v477 = vld [vmem:[#allocation7 + $0x34] sm:$0xf]
        %v478 = vld [vmem:[#allocation7 + $0x38] sm:$0xf]
        %v479 = vld [vmem:[#allocation7 + $0x3c] sm:$0xf]
        %v496 = vunpack.c.l.b16 %v464
        %v497 = vunpack.c.l.b16 %v465
        %v498 = vunpack.c.l.b16 %v466
        %v499 = vunpack.c.l.b16 %v467
        %v500 = vunpack.c.l.b16 %v468
        %v501 = vunpack.c.l.b16 %v469
        %v502 = vunpack.c.l.b16 %v470
        %v503 = vunpack.c.l.b16 %v471
        %v504 = vunpack.c.l.b16 %v472
        %v505 = vunpack.c.l.b16 %v473
        %v506 = vunpack.c.l.b16 %v474
        %v507 = vunpack.c.l.b16 %v475
        %v508 = vunpack.c.l.b16 %v476
        %v509 = vunpack.c.l.b16 %v477
        %v510 = vunpack.c.l.b16 %v478
        %v511 = vunpack.c.l.b16 %v479
        %v512 = vpack.c.b16 %v497, %v496
        %v513 = vpack.c.b16 %v499, %v498
        %v514 = vpack.c.b16 %v501, %v500
        %v515 = vpack.c.b16 %v503, %v502
        %v516 = vpack.c.b16 %v505, %v504
        %v517 = vpack.c.b16 %v507, %v506
        %v518 = vpack.c.b16 %v509, %v508
        %v519 = vpack.c.b16 %v511, %v510
        %528 = vmatprep.subr.bf16.mxu0 0
        %529 = vmatpush1.bf16.msra.mxu0 %v512
        %530 = vmatprep.subr.bf16.mxu0 0
        %531 = vmatpush1.bf16.msra.mxu0 %v513
        %532 = vmatprep.subr.bf16.mxu0 0
        %533 = vmatpush1.bf16.msra.mxu0 %v514
        %534 = vmatprep.subr.bf16.mxu0 0
        %535 = vmatpush1.bf16.msra.mxu0 %v515
        %536 = vmatprep.subr.bf16.mxu0 0
        %537 = vmatpush1.bf16.msra.mxu0 %v516
        %538 = vmatprep.subr.bf16.mxu0 0
        %539 = vmatpush1.bf16.msra.mxu0 %v517
        %540 = vmatprep.subr.bf16.mxu0 0
        %541 = vmatpush1.bf16.msra.mxu0 %v518
        %542 = vmatprep.subr.bf16.mxu0 0
        %543 = vmatpush1.bf16.msra.mxu0 %v519
        %544 = vmatprep.subr.bf16.mxu0 0
        %545 = vmatpush1.bf16.msra.mxu0 0
        %546 = vmatprep.subr.bf16.mxu0 0
        %547 = vmatpush1.bf16.msra.mxu0 0
        %548 = vmatprep.subr.bf16.mxu0 0
        %549 = vmatpush1.bf16.msra.mxu0 0
        %550 = vmatprep.subr.bf16.mxu0 0
        %551 = vmatpush1.bf16.msra.mxu0 0
        %552 = vmatprep.subr.bf16.mxu0 0
        %553 = vmatpush1.bf16.msra.mxu0 0
        %554 = vmatprep.subr.bf16.mxu0 0
        %555 = vmatpush1.bf16.msra.mxu0 0
        %556 = vmatprep.subr.bf16.mxu0 0
        %557 = vmatpush1.bf16.msra.mxu0 0
        %558 = vmatprep.subr.bf16.mxu0 0
        %559 = vmatpush1.bf16.msra.mxu0 0
        %560 = vmatprep.mubr.bf16.mxu0 0
        %561 = vmatmul.mubr.bf16.gmra.mrb[0].mxu0 %v456
        %v562 = vpop.f32.mrb[0].mxu0
        %v563 = vadd.f32 0.0, %v562
        %v564 = vpop.f32.mrb[0].mxu0
        %v565 = vpop.f32.mrb[0].mxu0
        %v566 = vadd.f32 0.0, %v565
        %v567 = vpop.f32.mrb[0].mxu0
        %568 = vmatprep.mubr.bf16.mxu0 0
        %569 = vmatmul.mubr.bf16.gmra.mrb[0].mxu0 %v457
        %v570 = vpop.f32.mrb[0].mxu0
        %v571 = vadd.f32 0.0, %v570
        %v572 = vpop.f32.mrb[0].mxu0
        %v573 = vpop.f32.mrb[0].mxu0
        %v574 = vadd.f32 0.0, %v573
        %v575 = vpop.f32.mrb[0].mxu0
        %576 = vmatprep.mubr.bf16.mxu0 0
        %577 = vmatmul.mubr.bf16.gmra.mrb[0].mxu0 %v458
        %v578 = vpop.f32.mrb[0].mxu0
        %v579 = vadd.f32 0.0, %v578
        %v580 = vpop.f32.mrb[0].mxu0
        %v581 = vpop.f32.mrb[0].mxu0
        %v582 = vadd.f32 0.0, %v581
        %v583 = vpop.f32.mrb[0].mxu0
        %584 = vmatprep.mubr.bf16.mxu0 0
        %585 = vmatmul.mubr.bf16.gmra.mrb[0].mxu0 %v459
        %v586 = vpop.f32.mrb[0].mxu0
        %v587 = vadd.f32 0.0, %v586
        %v588 = vpop.f32.mrb[0].mxu0
        %v589 = vpop.f32.mrb[0].mxu0
        %v590 = vadd.f32 0.0, %v589
        %v591 = vpop.f32.mrb[0].mxu0
        %592 = vmatprep.mubr.bf16.mxu0 0
        %593 = vmatmul.mubr.bf16.gmra.mrb[0].mxu0 %v460
        %v594 = vpop.f32.mrb[0].mxu0
        %v595 = vadd.f32 0.0, %v594
        %v596 = vpop.f32.mrb[0].mxu0
        %v597 = vpop.f32.mrb[0].mxu0
        %v598 = vadd.f32 0.0, %v597
        %v599 = vpop.f32.mrb[0].mxu0
        %600 = vmatprep.mubr.bf16.mxu0 0
        %601 = vmatmul.mubr.bf16.gmra.mrb[0].mxu0 %v461
        %v602 = vpop.f32.mrb[0].mxu0
        %v603 = vadd.f32 0.0, %v602
        %v604 = vpop.f32.mrb[0].mxu0
        %v605 = vpop.f32.mrb[0].mxu0
        %v606 = vadd.f32 0.0, %v605
        %v607 = vpop.f32.mrb[0].mxu0
        %608 = vmatprep.mubr.bf16.mxu0 0
        %609 = vmatmul.mubr.bf16.gmra.mrb[0].mxu0 %v462
        %v610 = vpop.f32.mrb[0].mxu0
        %v611 = vadd.f32 0.0, %v610
        %v612 = vpop.f32.mrb[0].mxu0
        %v613 = vpop.f32.mrb[0].mxu0
        %v614 = vadd.f32 0.0, %v613
        %v615 = vpop.f32.mrb[0].mxu0
        %616 = vmatprep.mubr.bf16.mxu0 0
        %617 = vmatmul.mubr.bf16.gmra.mrb[0].mxu0 %v463
        %v618 = vpop.f32.mrb[0].mxu0
        %v619 = vadd.f32 0.0, %v618
        %v620 = vpop.f32.mrb[0].mxu0
        %v621 = vpop.f32.mrb[0].mxu0
        %v622 = vadd.f32 0.0, %v621
        %v623 = vpop.f32.mrb[0].mxu0
        %624 = vdwg.mxu0
        %v625 = vmul.f32 %v563, %v563
        %v626 = vmul.f32 %v566, %v566
        %v627 = vmul.f32 %v571, %v571
        %v628 = vmul.f32 %v574, %v574
        %v629 = vmul.f32 %v579, %v579
        %v630 = vmul.f32 %v582, %v582
        %v631 = vmul.f32 %v587, %v587
        %v632 = vmul.f32 %v590, %v590
        %v633 = vmul.f32 %v595, %v595
        %v634 = vmul.f32 %v598, %v598
        %v635 = vmul.f32 %v603, %v603
        %v636 = vmul.f32 %v606, %v606
        %v637 = vmul.f32 %v611, %v611
        %v638 = vmul.f32 %v614, %v614
        %v639 = vmul.f32 %v619, %v619
        %v640 = vmul.f32 %v622, %v622
        %641 = vrot.lane.b32.xlu0 %v625, 64
        %v642 = vpop.permute.xlu0 %641
        %643 = vrot.lane.b32.xlu0 %v626, 64
        %v644 = vpop.permute.xlu0 %643
        %645 = vrot.lane.b32.xlu0 %v627, 64
        %v646 = vpop.permute.xlu0 %645
        %647 = vrot.lane.b32.xlu0 %v628, 64
        %v648 = vpop.permute.xlu0 %647
        %649 = vrot.lane.b32.xlu0 %v629, 64
        %v650 = vpop.permute.xlu0 %649
        %651 = vrot.lane.b32.xlu0 %v630, 64
        %v652 = vpop.permute.xlu0 %651
        %653 = vrot.lane.b32.xlu0 %v631, 64
        %v654 = vpop.permute.xlu0 %653
        %655 = vrot.lane.b32.xlu0 %v632, 64
        %v656 = vpop.permute.xlu0 %655
        %657 = vrot.lane.b32.xlu0 %v633, 64
        %v658 = vpop.permute.xlu0 %657
        %659 = vrot.lane.b32.xlu0 %v634, 64
        %v660 = vpop.permute.xlu0 %659
        %661 = vrot.lane.b32.xlu0 %v635, 64
        %v662 = vpop.permute.xlu0 %661
        %663 = vrot.lane.b32.xlu0 %v636, 64
        %v664 = vpop.permute.xlu0 %663
        %665 = vrot.lane.b32.xlu0 %v637, 64
        %v666 = vpop.permute.xlu0 %665
        %667 = vrot.lane.b32.xlu0 %v638, 64
        %v668 = vpop.permute.xlu0 %667
        %669 = vrot.lane.b32.xlu0 %v639, 64
        %v670 = vpop.permute.xlu0 %669
        %671 = vrot.lane.b32.xlu0 %v640, 64
        %v672 = vpop.permute.xlu0 %671
        %vm673 = vcmp.ge.s32.totalorder %v392, 1
        %vm674 = vcmp.le.s32.totalorder %v392, 63
        %vm675 = vmand %vm673, %vm674
        %v676 = vsel %vm675, %v642, 0.0
        %v677 = vsel %vm675, %v644, 0.0
        %v678 = vsel %vm675, %v646, 0.0
        %v679 = vsel %vm675, %v648, 0.0
        %v680 = vsel %vm675, %v650, 0.0
        %v681 = vsel %vm675, %v652, 0.0
        %v682 = vsel %vm675, %v654, 0.0
        %v683 = vsel %vm675, %v656, 0.0
        %v684 = vsel %vm675, %v658, 0.0
        %v685 = vsel %vm675, %v660, 0.0
        %v686 = vsel %vm675, %v662, 0.0
        %v687 = vsel %vm675, %v664, 0.0
        %v688 = vsel %vm675, %v666, 0.0
        %v689 = vsel %vm675, %v668, 0.0
        %v690 = vsel %vm675, %v670, 0.0
        %v691 = vsel %vm675, %v672, 0.0
        %v692 = vadd.f32 %v625, %v676
        %v693 = vadd.f32 %v626, %v677
        %v694 = vadd.f32 %v627, %v678
        %v695 = vadd.f32 %v628, %v679
        %v696 = vadd.f32 %v629, %v680
        %v697 = vadd.f32 %v630, %v681
        %v698 = vadd.f32 %v631, %v682
        %v699 = vadd.f32 %v632, %v683
        %v700 = vadd.f32 %v633, %v684
        %v701 = vadd.f32 %v634, %v685
        %v702 = vadd.f32 %v635, %v686
        %v703 = vadd.f32 %v636, %v687
        %v704 = vadd.f32 %v637, %v688
        %v705 = vadd.f32 %v638, %v689
        %v706 = vadd.f32 %v639, %v690
        %v707 = vadd.f32 %v640, %v691
        %v708 = vld [vmem:[#allocation8] sm:$0xff]
        %v709 = vld [vmem:[#allocation8 + $0x8] sm:$0xff]
        %710 = vmatprep.subr.mxu0 0.0
        %711 = vmatpush1.xpose.msra.mxu0 %v692
        %712 = vmatprep.subr.mxu0 0.0
        %713 = vmatpush1.xpose.msra.mxu0 %v693
        %714 = vmatprep.subr.mxu0 0.0
        %715 = vmatpush1.xpose.msra.mxu0 %v694
        %716 = vmatprep.subr.mxu0 0.0
        %717 = vmatpush1.xpose.msra.mxu0 %v695
        %718 = vmatprep.subr.mxu0 0.0
        %719 = vmatpush1.xpose.msra.mxu0 %v696
        %720 = vmatprep.subr.mxu0 0.0
        %721 = vmatpush1.xpose.msra.mxu0 %v697
        %722 = vmatprep.subr.mxu0 0.0
        %723 = vmatpush1.xpose.msra.mxu0 %v698
        %724 = vmatprep.subr.mxu0 0.0
        %725 = vmatpush1.xpose.msra.mxu0 %v699
        %726 = vmatprep.subr.mxu0 0.0
        %727 = vmatpush1.xpose.msra.mxu0 %v700
        %728 = vmatprep.subr.mxu0 0.0
        %729 = vmatpush1.xpose.msra.mxu0 %v701
        %730 = vmatprep.subr.mxu0 0.0
        %731 = vmatpush1.xpose.msra.mxu0 %v702
        %732 = vmatprep.subr.mxu0 0.0
        %733 = vmatpush1.xpose.msra.mxu0 %v703
        %734 = vmatprep.subr.mxu0 0.0
        %735 = vmatpush1.xpose.msra.mxu0 %v704
        %736 = vmatprep.subr.mxu0 0.0
        %737 = vmatpush1.xpose.msra.mxu0 %v705
        %738 = vmatprep.subr.mxu0 0.0
        %739 = vmatpush1.xpose.msra.mxu0 %v706
        %740 = vmatprep.subr.mxu0 0.0
        %741 = vmatpush1.xpose.msra.mxu0 %v707
        %742 = vmatprep.subr.mxu0 0.0
        %743 = vmatpush1.xpose.msra.mxu0 0.0
        %744 = vmatprep.subr.mxu0 0.0
        %745 = vmatpush1.xpose.msra.mxu0 0.0
        %746 = vmatprep.subr.mxu0 0.0
        %747 = vmatpush1.xpose.msra.mxu0 0.0
        %748 = vmatprep.subr.mxu0 0.0
        %749 = vmatpush1.xpose.msra.mxu0 0.0
        %750 = vmatprep.subr.mxu0 0.0
        %751 = vmatpush1.xpose.msra.mxu0 0.0
        %752 = vmatprep.subr.mxu0 0.0
        %753 = vmatpush1.xpose.msra.mxu0 0.0
        %754 = vmatprep.subr.mxu0 0.0
        %755 = vmatpush1.xpose.msra.mxu0 0.0
        %756 = vmatprep.subr.mxu0 0.0
        %757 = vmatpush1.xpose.msra.mxu0 0.0
        %758 = vmatprep.subr.mxu0 0.0
        %759 = vmatpush1.xpose.msra.mxu0 0.0
        %760 = vmatprep.subr.mxu0 0.0
        %761 = vmatpush1.xpose.msra.mxu0 0.0
        %762 = vmatprep.subr.mxu0 0.0
        %763 = vmatpush1.xpose.msra.mxu0 0.0
        %764 = vmatprep.subr.mxu0 0.0
        %765 = vmatpush1.xpose.msra.mxu0 0.0
        %766 = vmatprep.subr.mxu0 0.0
        %767 = vmatpush1.xpose.msra.mxu0 0.0
        %768 = vmatprep.subr.mxu0 0.0
        %769 = vmatpush1.xpose.msra.mxu0 0.0
        %770 = vmatprep.subr.mxu0 0.0
        %771 = vmatpush1.xpose.msra.mxu0 0.0
        %772 = vmatprep.subr.mxu0 0.0
        %773 = vmatpush1.xpose.msra.mxu0 0.0
        %774 = vmatprep.mubr.f32.mxu0 0.0
        %775 = vmatmul.mubr.f32.gmra.mrb[0].mxu0 %v708
        %v776 = vpop.f32.mrb[0].mxu0
        %v777 = vadd.f32 0.0, %v776
        %v778 = vpop.f32.mrb[0].mxu0
        %779 = vmatprep.mubr.f32.mxu0 0.0
        %780 = vmatmul.mubr.f32.gmra.mrb[0].mxu0 %v709
        %v781 = vpop.f32.mrb[0].mxu0
        %v782 = vadd.f32 0.0, %v781
        %v783 = vpop.f32.mrb[0].mxu0
        %784 = vdwg.mxu0
        %v785 = vpack.c.bf16 %v782, %v777
        %v786 = vld [vmem:[#allocation10] sm:$0xf]
        %v787 = vld [vmem:[#allocation10 + $0x4] sm:$0xf]
        %v788 = vld [vmem:[#allocation10 + $0x8] sm:$0xf]
        %v789 = vld [vmem:[#allocation10 + $0xc] sm:$0xf]
        %v790 = vld [vmem:[#allocation10 + $0x10] sm:$0xf]
        %v791 = vld [vmem:[#allocation10 + $0x14] sm:$0xf]
        %v792 = vld [vmem:[#allocation10 + $0x18] sm:$0xf]
        %v793 = vld [vmem:[#allocation10 + $0x1c] sm:$0xf]
        %v794 = vld [vmem:[#allocation10 + $0x20] sm:$0xf]
        %v795 = vld [vmem:[#allocation10 + $0x24] sm:$0xf]
        %v796 = vld [vmem:[#allocation10 + $0x28] sm:$0xf]
        %v797 = vld [vmem:[#allocation10 + $0x2c] sm:$0xf]
        %v798 = vld [vmem:[#allocation10 + $0x30] sm:$0xf]
        %v799 = vld [vmem:[#allocation10 + $0x34] sm:$0xf]
        %v800 = vld [vmem:[#allocation10 + $0x38] sm:$0xf]
        %v801 = vld [vmem:[#allocation10 + $0x3c] sm:$0xf]
        %v818 = vunpack.c.l.b16 %v786
        %v819 = vunpack.c.l.b16 %v787
        %v820 = vunpack.c.l.b16 %v788
        %v821 = vunpack.c.l.b16 %v789
        %v822 = vunpack.c.l.b16 %v790
        %v823 = vunpack.c.l.b16 %v791
        %v824 = vunpack.c.l.b16 %v792
        %v825 = vunpack.c.l.b16 %v793
        %v826 = vunpack.c.l.b16 %v794
        %v827 = vunpack.c.l.b16 %v795
        %v828 = vunpack.c.l.b16 %v796
        %v829 = vunpack.c.l.b16 %v797
        %v830 = vunpack.c.l.b16 %v798
        %v831 = vunpack.c.l.b16 %v799
        %v832 = vunpack.c.l.b16 %v800
        %v833 = vunpack.c.l.b16 %v801
        %v834 = vpack.c.b16 %v819, %v818
        %v835 = vpack.c.b16 %v821, %v820
        %v836 = vpack.c.b16 %v823, %v822
        %v837 = vpack.c.b16 %v825, %v824
        %v838 = vpack.c.b16 %v827, %v826
        %v839 = vpack.c.b16 %v829, %v828
        %v840 = vpack.c.b16 %v831, %v830
        %v841 = vpack.c.b16 %v833, %v832
        %850 = vmatprep.subr.bf16.mxu0 0
        %851 = vmatpush1.bf16.msra.mxu0 %v834
        %852 = vmatprep.subr.bf16.mxu0 0
        %853 = vmatpush1.bf16.msra.mxu0 %v835
        %854 = vmatprep.subr.bf16.mxu0 0
        %855 = vmatpush1.bf16.msra.mxu0 %v836
        %856 = vmatprep.subr.bf16.mxu0 0
        %857 = vmatpush1.bf16.msra.mxu0 %v837
        %858 = vmatprep.subr.bf16.mxu0 0
        %859 = vmatpush1.bf16.msra.mxu0 %v838
        %860 = vmatprep.subr.bf16.mxu0 0
        %861 = vmatpush1.bf16.msra.mxu0 %v839
        %862 = vmatprep.subr.bf16.mxu0 0
        %863 = vmatpush1.bf16.msra.mxu0 %v840
        %864 = vmatprep.subr.bf16.mxu0 0
        %865 = vmatpush1.bf16.msra.mxu0 %v841
        %866 = vmatprep.subr.bf16.mxu0 0
        %867 = vmatpush1.bf16.msra.mxu0 0
        %868 = vmatprep.subr.bf16.mxu0 0
        %869 = vmatpush1.bf16.msra.mxu0 0
        %870 = vmatprep.subr.bf16.mxu0 0
        %871 = vmatpush1.bf16.msra.mxu0 0
        %872 = vmatprep.subr.bf16.mxu0 0
        %873 = vmatpush1.bf16.msra.mxu0 0
        %874 = vmatprep.subr.bf16.mxu0 0
        %875 = vmatpush1.bf16.msra.mxu0 0
        %876 = vmatprep.subr.bf16.mxu0 0
        %877 = vmatpush1.bf16.msra.mxu0 0
        %878 = vmatprep.subr.bf16.mxu0 0
        %879 = vmatpush1.bf16.msra.mxu0 0
        %880 = vmatprep.subr.bf16.mxu0 0
        %881 = vmatpush1.bf16.msra.mxu0 0
        %882 = vmatprep.mubr.bf16.mxu0 0
        %883 = vmatmul.mubr.bf16.gmra.mrb[0].mxu0 %v785
        %v884 = vpop.f32.mrb[0].mxu0
        %v885 = vadd.f32 0.001, %v884
        %v886 = vpop.f32.mrb[0].mxu0
        %v887 = vpop.f32.mrb[0].mxu0
        %v888 = vadd.f32 0.001, %v887
        %v889 = vpop.f32.mrb[0].mxu0
        %890 = vdwg.mxu0
        %v891 = vlog2.pop %v885
        %v892 = vmul.f32 %v891, 0.6931472
        %v893 = vlog2.pop %v888
        %v894 = vmul.f32 %v893, 0.6931472
        %895 = vst [vmem:[%s350] sm:$0xff] %v892
        %896 = vst [vmem:[%s350 + $0x8] sm:$0xff] %v894
        %s897 = sand.u32 %s171, 1
        %s898 = scalar_lea.sflag [#allocation4], %s897
        %s899 = sand.u32 %s171, 1
        %s900 = smul.addr %s899, 16
        %s901 = scalar_lea.vmem [#allocation11], %s900
        // Predicated region
        $region61: #{tpu_custom_call.1} parent=39 // pred_check
          %p902 = pneg %p181
        $region62: #{tpu_custom_call.1} parent=39 // pred_check_branch
          %904 = sbr.rel (%p902) target = $region64
        $region63: #{tpu_custom_call.1} parent=39 // pred_region
          %s906 = ssub.s32 256, 256
          %907 = vsyncadd %s898, %s906
          %s908 = smul.addr %s30, 2
          %s909 = sadd.s32 %s31, %s908
          %s910 = smul.addr %s909, 128
          %s911 = scalar_lea.hbm %s5, %s910
          %s912 = sshll.u32 %s901, 4
          %s913 = int_to_ptr.vmem [resolvable:$true] %s912
          %918 = dma.vmem_to_hbm [thread:$0]  %s913, 256, %s911, %s898, 128, 128, 8
        $region64: #{tpu_custom_call.1} parent=39 // pred_fallthru
          _
      $region40: #{tpu_custom_call.1} parent=5 // pred_fallthru
        _
      %p919 = scmp.le.s32.totalorder 2, %s21
      // Predicated region
      $region65: #{tpu_custom_call.1} parent=5 // pred_check
        %p920 = pneg %p919
      $region66: #{tpu_custom_call.1} parent=5 // pred_check_branch
        %922 = sbr.rel (%p920) target = $region68
      $region67: #{tpu_custom_call.1} parent=5 // pred_region
        %s923 = ssub.s32 %s21, 2
        // Predicated region
        $region69: #{tpu_custom_call.1} parent=67 // pred_check
          %p924 = pneg %p187
        $region70: #{tpu_custom_call.1} parent=67 // pred_check_branch
          %926 = sbr.rel (%p924) target = $region72
        $region71: #{tpu_custom_call.1} parent=67 // pred_region
          %s927 = sand.u32 %s172, 1
          %s928 = scalar_lea.sflag [#allocation4], %s927
          %s929 = sand.u32 %s172, 1
          %s930 = smul.addr %s929, 16
          %s931 = scalar_lea.vmem [#allocation11], %s930
          %932 = dma.done %s928, 256
        $region72: #{tpu_custom_call.1} parent=67 // pred_fallthru
          _
      $region68: #{tpu_custom_call.1} parent=5 // pred_fallthru
        _
    $region6: #{tpu_custom_call.1} parent=1 // loop_footer
      %s25 = sadd.s32 1, %s21
    $region7: #{tpu_custom_call.1} parent=1 // loop_footer_branch
      %20 = sbr.rel target = $region3
    $region8: #{tpu_custom_call.1} parent=1 // loop_exit
      _
    %933 = vsyncpa [#allocation3], 1
    %s934 = scalar_lea.sflag [#allocation3], 1
    %935 = vsyncpa %s934, 1
    %936 = vsyncpa [#allocation6], 1
    %s937 = scalar_lea.sflag [#allocation6], 1
    %938 = vsyncpa %s937, 1
    %939 = vsyncpa [#allocation9], 1
    %940 = vsyncpa [#allocation4], 1
    %s941 = scalar_lea.sflag [#allocation4], 1
    %942 = vsyncpa %s941, 1

</llo_original>
